<compile_context>
chip_gen: v5e
topology: v5e:2x2
jax: 0.10.0
libtpu: 0.0.40
codegen_flags: <defaults>
</compile_context>

<pallas_src>
import functools

import numpy as np
import jax
import jax.numpy as jnp
from jax.experimental import pallas as pl
from jax.experimental.pallas import tpu as pltpu

SMOOTH_NR = 1e-5
SMOOTH_DR = 1e-5
LANE = 128


def _gwdl_ce_kernel(logits_ref, tgt_ref, ce_ref, err_ref, *, m_rows):
    n = pl.program_id(1)

    # Output blocks are per-batch accumulators (same block across the n axis);
    # zero them on the first spatial tile of each batch.
    @pl.when(n == 0)
    def _():
        ce_ref[...] = jnp.zeros_like(ce_ref)
        err_ref[...] = jnp.zeros_like(err_ref)

    logits = logits_ref[0].astype(jnp.float32)   # [C, tile_s, 128]
    tgt = tgt_ref[0]                             # [tile_s, 128] int32 (-1 == pad)
    C = logits.shape[0]

    rows = [logits[c] for c in range(C)]         # static slices along leading axis

    # Stable softmax pieces, unrolled over the LEADING class axis -> pure VPU.
    mx = rows[0]
    for c in range(1, C):
        mx = jnp.maximum(mx, rows[c])
    ex = [jnp.exp(rows[c] - mx) for c in range(C)]     # un-normalized probs
    se = ex[0]
    for c in range(1, C):
        se = se + ex[c]
    lse = mx + jnp.log(se)                             # [tile_s, 128]
    inv_se = pl.reciprocal(se, approx=True)            # EUP slot, ~free

    valid = tgt >= 0                                   # padded voxels excluded

    # Per-voxel gather of true-class logit and Wasserstein distance.
    # M is baked as static floats; the C x C loop is unrolled (C is small here,
    # an MXU one-hot matmul path would only pay off for larger C).
    true_logit = jnp.zeros_like(mx)
    wass_un = jnp.zeros_like(mx)
    for k in range(C):
        mask_k = (tgt == k).astype(jnp.float32)
        true_logit = true_logit + mask_k * rows[k]
        s_k = None
        for c in range(C):
            w = m_rows[k][c]
            if w == 0.0:
                continue                               # skip zero distances (diag)
            term = ex[c] if w == 1.0 else w * ex[c]
            s_k = term if s_k is None else s_k + term
        if s_k is not None:
            wass_un = wass_un + mask_k * s_k

    ce_vox = jnp.where(valid, lse - true_logit, 0.0)   # padded -> 0
    wass = wass_un * inv_se                            # padded: wass_un == 0

    # Lane-wide partial accumulation (plain VPU adds, unmasked stores);
    # cross-lane reductions are deferred to the JAX wrapper.
    ce_ref[0] = ce_ref[0] + ce_vox
    err_ref[0] = err_ref[0] + wass


def gwdl_ce_loss(y_pred, y_true, dist_matrix, *, tile_lanes=4096):
    """y_pred: [B, C, H, W] logits (NCHW, any float dtype).  y_true: [B, 1, H, W] labels."""
    B, C, H, W = y_pred.shape
    N = H * W

    # ---- spatial tiling: N -> (sublane, lane) tiles of (tile_s, 128) ----
    S = -(-N // LANE)                                  # sublane rows (ceil)
    tile_s_target = max(tile_lanes // LANE, 1)
    if S <= tile_s_target:
        tile_s = S                                     # single tile == full dim
    else:
        tile_s = max(8, (tile_s_target // 8) * 8)      # keep (8,128) alignment
    S_pad = -(-S // tile_s) * tile_s
    N_pad = S_pad * LANE

    # keep the native dtype for logits (cast to f32 inside the kernel)
    logits = y_pred.reshape(B, C, N)
    tgt = y_true.reshape(B, N).astype(jnp.int32)
    if N_pad != N:
        logits = jnp.pad(logits, ((0, 0), (0, 0), (0, N_pad - N)))
        tgt = jnp.pad(tgt, ((0, 0), (0, N_pad - N)), constant_values=-1)
    logits = logits.reshape(B, C, S_pad, LANE)
    tgt = tgt.reshape(B, S_pad, LANE)

    # ---- static, normalized Wasserstein distance matrix (MONAI behavior) ----
    m = np.asarray(dist_matrix, dtype=np.float32)
    if float(m.max()) != 1.0:
        m = m / m.max()
    m_rows = tuple(tuple(float(v) for v in row) for row in m)

    kernel = functools.partial(_gwdl_ce_kernel, m_rows=m_rows)

    # explicit VMEM budget: double-buffered inputs + 2 resident output blocks
    in_bytes = tile_s * LANE * (C * jnp.dtype(y_pred.dtype).itemsize + 4)
    out_bytes = 2 * tile_s * LANE * 4
    vmem_limit = int(min(64 << 20, max(32 << 20, 4 * (2 * in_bytes + out_bytes))))

    ce_part, err_part = pl.pallas_call(
        kernel,
        out_shape=(jax.ShapeDtypeStruct((B, tile_s, LANE), jnp.float32),
                   jax.ShapeDtypeStruct((B, tile_s, LANE), jnp.float32)),
        grid_spec=pltpu.PrefetchScalarGridSpec(
            num_scalar_prefetch=0,
            grid=(B, S_pad // tile_s),
            in_specs=[
                pl.BlockSpec((1, C, tile_s, LANE), lambda b, n: (b, 0, n, 0)),
                pl.BlockSpec((1, tile_s, LANE), lambda b, n: (b, n, 0)),
            ],
            out_specs=[
                pl.BlockSpec((1, tile_s, LANE), lambda b, n: (b, 0, 0)),
                pl.BlockSpec((1, tile_s, LANE), lambda b, n: (b, 0, 0)),
            ],
        ),
        compiler_params=pltpu.CompilerParams(
            dimension_semantics=("parallel", "arbitrary"),
            vmem_limit_bytes=vmem_limit),
    )(logits, tgt)

    # ---- cheap finalize in plain JAX (deferred reductions) ----
    ce = jnp.sum(ce_part) / float(B * N)
    err = jnp.sum(err_part, axis=(1, 2))               # per-batch sum(wass)
    tp = float(N) - err                                # sum(1 - wass) over valid voxels
    dice = (2.0 * tp + SMOOTH_NR) / (err + tp + SMOOTH_DR)
    gwdl = jnp.mean(1.0 - dice)
    return ce + gwdl


def reference(y_pred, y_true, dist_matrix):
    """Pure-JAX reference mirroring the PyTorch/MONAI semantics."""
    m = np.asarray(dist_matrix, dtype=np.float32)
    if float(m.max()) != 1.0:
        m = m / m.max()
    m = jnp.asarray(m)
    B, C, H, W = y_pred.shape
    N = H * W
    logits = y_pred.reshape(B, C, N).astype(jnp.float32)
    tgt = y_true.reshape(B, N).astype(jnp.int32)

    probs = jax.nn.softmax(logits, axis=1)                              # [B, C, N]
    m_sel = m[tgt]                                                      # [B, N, C]
    wass = jnp.sum(m_sel * jnp.transpose(probs, (0, 2, 1)), axis=-1)    # [B, N]
    tp = jnp.sum(1.0 - wass, axis=1)
    err = jnp.sum(wass, axis=1)
    dice = (2.0 * tp + SMOOTH_NR) / (err + tp + SMOOTH_DR)
    gwdl = jnp.mean(1.0 - dice)

    lse = jax.nn.logsumexp(logits, axis=1)                              # [B, N]
    true_logit = jnp.take_along_axis(logits, tgt[:, None, :], axis=1)[:, 0, :]
    ce = jnp.mean(lse - true_logit)
    return ce + gwdl


if __name__ == "__main__":
    B, C, H, W = 2, 4, 16, 16
    key = jax.random.PRNGKey(0)
    k1, k2 = jax.random.split(key)

    y_pred = jax.random.normal(k1, (B, C, H, W), dtype=jnp.float32)
    # labels stored as float (as typical segmentation pipelines do); cast in wrapper
    y_true = jax.random.randint(k2, (B, 1, H, W), 0, C).astype(jnp.float32)

    # deterministic inter-class distance matrix (constructor argument)
    dist = np.abs(np.arange(C)[:, None] - np.arange(C)[None, :]).astype(np.float32)

    loss = gwdl_ce_loss(y_pred, y_true, dist)
    loss = jax.block_until_ready(loss)

    ref = jax.block_until_ready(reference(y_pred, y_true, dist))
    # slightly looser tolerance: kernel deliberately uses the EUP approximate
    # reciprocal for the softmax denominator of the Wasserstein term.
    assert np.allclose(np.asarray(loss), np.asarray(ref), rtol=2e-3, atol=2e-3), (loss, ref)

    print("KERNEL_OK")
</pallas_src>

<mosaic_0001>
module attributes {stable_mosaic.version = 11 : i64} {
  func.func @_gwdl_ce_kernel(%arg0: i32, %arg1: i32, %arg2: memref<1x4x2x128xf32, #tpu.memory_space<vmem>>, %arg3: memref<1x2x128xi32, #tpu.memory_space<vmem>>, %arg4: memref<1x2x128xf32, #tpu.memory_space<vmem>>, %arg5: memref<1x2x128xf32, #tpu.memory_space<vmem>>) attributes {dimension_semantics = [#tpu.dimension_semantics<parallel>, #tpu.dimension_semantics<arbitrary>], iteration_bounds = array<i64: 2, 1>, scalar_prefetch = 0 : i64, scratch_operands = 0 : i64, tpu.core_type = #tpu.core_type<tc>, window_params = [{transform_indices = @transform_0, window_bounds = array<i64: 1, 4, 2, 128>}, {transform_indices = @transform_1, window_bounds = array<i64: 1, 2, 128>}, {transform_indices = @transform_2, window_bounds = array<i64: 1, 2, 128>}, {transform_indices = @transform_3, window_bounds = array<i64: 1, 2, 128>}]} {
    %c0_i32 = arith.constant 0 : i32
    %0 = arith.cmpi eq, %arg1, %c0_i32 : i32
    %1 = arith.extui %0 : i1 to i32
    %c0_i32_0 = arith.constant 0 : i32
    %2 = arith.cmpi ne, %1, %c0_i32_0 : i32
    scf.if %2 {
      %cst_33 = arith.constant 0.000000e+00 : f32
      %112 = vector.broadcast %cst_33 : f32 to vector<1x2x128xf32>
      %c0_34 = arith.constant 0 : index
      %c0_35 = arith.constant 0 : index
      %c0_36 = arith.constant 0 : index
      %113 = vector.load %arg4[%c0_34, %c0_35, %c0_36] : memref<1x2x128xf32, #tpu.memory_space<vmem>>, vector<1x2x128xf32>
      tpu.vector_store %arg4[%c0_34, %c0_35, %c0_36], %112 {strides = array<i32>} : memref<1x2x128xf32, #tpu.memory_space<vmem>>, vector<1x2x128xf32>,
      %cst_37 = arith.constant 0.000000e+00 : f32
      %114 = vector.broadcast %cst_37 : f32 to vector<1x2x128xf32>
      %c0_38 = arith.constant 0 : index
      %c0_39 = arith.constant 0 : index
      %c0_40 = arith.constant 0 : index
      %115 = vector.load %arg5[%c0_38, %c0_39, %c0_40] : memref<1x2x128xf32, #tpu.memory_space<vmem>>, vector<1x2x128xf32>
      tpu.vector_store %arg5[%c0_38, %c0_39, %c0_40], %114 {strides = array<i32>} : memref<1x2x128xf32, #tpu.memory_space<vmem>>, vector<1x2x128xf32>,
    } else {
    }
    %c0 = arith.constant 0 : index
    %c0_1 = arith.constant 0 : index
    %c0_2 = arith.constant 0 : index
    %c0_3 = arith.constant 0 : index
    %3 = vector.load %arg2[%c0, %c0_1, %c0_2, %c0_3] : memref<1x4x2x128xf32, #tpu.memory_space<vmem>>, vector<1x4x2x128xf32>
    %4 = vector.shape_cast %3 : vector<1x4x2x128xf32> to vector<4x2x128xf32>
    %c0_4 = arith.constant 0 : index
    %c0_5 = arith.constant 0 : index
    %c0_6 = arith.constant 0 : index
    %5 = vector.load %arg3[%c0_4, %c0_5, %c0_6] : memref<1x2x128xi32, #tpu.memory_space<vmem>>, vector<1x2x128xi32>
    %6 = vector.shape_cast %5 : vector<1x2x128xi32> to vector<2x128xi32>
    %7 = vector.extract_strided_slice %4 {offsets = [0, 0, 0], sizes = [1, 2, 128], strides = [1, 1, 1]} : vector<4x2x128xf32> to vector<1x2x128xf32>
    %8 = vector.shape_cast %7 : vector<1x2x128xf32> to vector<2x128xf32>
    %9 = vector.extract_strided_slice %4 {offsets = [1, 0, 0], sizes = [1, 2, 128], strides = [1, 1, 1]} : vector<4x2x128xf32> to vector<1x2x128xf32>
    %10 = vector.shape_cast %9 : vector<1x2x128xf32> to vector<2x128xf32>
    %11 = vector.extract_strided_slice %4 {offsets = [2, 0, 0], sizes = [1, 2, 128], strides = [1, 1, 1]} : vector<4x2x128xf32> to vector<1x2x128xf32>
    %12 = vector.shape_cast %11 : vector<1x2x128xf32> to vector<2x128xf32>
    %13 = vector.extract_strided_slice %4 {offsets = [3, 0, 0], sizes = [1, 2, 128], strides = [1, 1, 1]} : vector<4x2x128xf32> to vector<1x2x128xf32>
    %14 = vector.shape_cast %13 : vector<1x2x128xf32> to vector<2x128xf32>
    %15 = arith.maximumf %8, %10 : vector<2x128xf32>
    %16 = arith.maximumf %15, %12 : vector<2x128xf32>
    %17 = arith.maximumf %16, %14 : vector<2x128xf32>
    %18 = arith.subf %8, %17 : vector<2x128xf32>
    %19 = math.exp %18 : vector<2x128xf32>
    %20 = arith.subf %10, %17 : vector<2x128xf32>
    %21 = math.exp %20 : vector<2x128xf32>
    %22 = arith.subf %12, %17 : vector<2x128xf32>
    %23 = math.exp %22 : vector<2x128xf32>
    %24 = arith.subf %14, %17 : vector<2x128xf32>
    %25 = math.exp %24 : vector<2x128xf32>
    %26 = arith.addf %19, %21 : vector<2x128xf32>
    %27 = arith.addf %26, %23 : vector<2x128xf32>
    %28 = arith.addf %27, %25 : vector<2x128xf32>
    %29 = math.log %28 : vector<2x128xf32>
    %30 = arith.addf %17, %29 : vector<2x128xf32>
    %31 = tpu.reciprocal %28 {approx = true} : vector<2x128xf32> -> vector<2x128xf32>
    %c0_i32_7 = arith.constant 0 : i32
    %32 = vector.broadcast %c0_i32_7 : i32 to vector<2x128xi32>
    %33 = arith.cmpi sge, %6, %32 : vector<2x128xi32>
    %cst = arith.constant 0.000000e+00 : f32
    %34 = vector.broadcast %cst : f32 to vector<2x128xf32>
    %cst_8 = arith.constant 0.000000e+00 : f32
    %35 = vector.broadcast %cst_8 : f32 to vector<2x128xf32>
    %c0_i32_9 = arith.constant 0 : i32
    %36 = vector.broadcast %c0_i32_9 : i32 to vector<2x128xi32>
    %37 = arith.cmpi eq, %6, %36 : vector<2x128xi32>
    %38 = arith.extui %37 : vector<2x128xi1> to vector<2x128xi32>
    %39 = arith.sitofp %38 : vector<2x128xi32> to vector<2x128xf32>
    %40 = arith.mulf %39, %8 : vector<2x128xf32>
    %41 = arith.addf %34, %40 : vector<2x128xf32>
    %cst_10 = arith.constant 0.333333343 : f32
    %42 = vector.broadcast %cst_10 : f32 to vector<2x128xf32>
    %43 = arith.mulf %42, %21 : vector<2x128xf32>
    %cst_11 = arith.constant 0.666666686 : f32
    %44 = vector.broadcast %cst_11 : f32 to vector<2x128xf32>
    %45 = arith.mulf %44, %23 : vector<2x128xf32>
    %46 = arith.addf %43, %45 : vector<2x128xf32>
    %47 = arith.addf %46, %25 : vector<2x128xf32>
    %48 = arith.mulf %39, %47 : vector<2x128xf32>
    %49 = arith.addf %35, %48 : vector<2x128xf32>
    %c1_i32 = arith.constant 1 : i32
    %50 = vector.broadcast %c1_i32 : i32 to vector<2x128xi32>
    %51 = arith.cmpi eq, %6, %50 : vector<2x128xi32>
    %52 = arith.extui %51 : vector<2x128xi1> to vector<2x128xi32>
    %53 = arith.sitofp %52 : vector<2x128xi32> to vector<2x128xf32>
    %54 = arith.mulf %53, %10 : vector<2x128xf32>
    %55 = arith.addf %41, %54 : vector<2x128xf32>
    %cst_12 = arith.constant 0.333333343 : f32
    %56 = vector.broadcast %cst_12 : f32 to vector<2x128xf32>
    %57 = arith.mulf %56, %19 : vector<2x128xf32>
    %cst_13 = arith.constant 0.333333343 : f32
    %58 = vector.broadcast %cst_13 : f32 to vector<2x128xf32>
    %59 = arith.mulf %58, %23 : vector<2x128xf32>
    %60 = arith.addf %57, %59 : vector<2x128xf32>
    %cst_14 = arith.constant 0.666666686 : f32
    %61 = vector.broadcast %cst_14 : f32 to vector<2x128xf32>
    %62 = arith.mulf %61, %25 : vector<2x128xf32>
    %63 = arith.addf %60, %62 : vector<2x128xf32>
    %64 = arith.mulf %53, %63 : vector<2x128xf32>
    %65 = arith.addf %49, %64 : vector<2x128xf32>
    %c2_i32 = arith.constant 2 : i32
    %66 = vector.broadcast %c2_i32 : i32 to vector<2x128xi32>
    %67 = arith.cmpi eq, %6, %66 : vector<2x128xi32>
    %68 = arith.extui %67 : vector<2x128xi1> to vector<2x128xi32>
    %69 = arith.sitofp %68 : vector<2x128xi32> to vector<2x128xf32>
    %70 = arith.mulf %69, %12 : vector<2x128xf32>
    %71 = arith.addf %55, %70 : vector<2x128xf32>
    %cst_15 = arith.constant 0.666666686 : f32
    %72 = vector.broadcast %cst_15 : f32 to vector<2x128xf32>
    %73 = arith.mulf %72, %19 : vector<2x128xf32>
    %cst_16 = arith.constant 0.333333343 : f32
    %74 = vector.broadcast %cst_16 : f32 to vector<2x128xf32>
    %75 = arith.mulf %74, %21 : vector<2x128xf32>
    %76 = arith.addf %73, %75 : vector<2x128xf32>
    %cst_17 = arith.constant 0.333333343 : f32
    %77 = vector.broadcast %cst_17 : f32 to vector<2x128xf32>
    %78 = arith.mulf %77, %25 : vector<2x128xf32>
    %79 = arith.addf %76, %78 : vector<2x128xf32>
    %80 = arith.mulf %69, %79 : vector<2x128xf32>
    %81 = arith.addf %65, %80 : vector<2x128xf32>
    %c3_i32 = arith.constant 3 : i32
    %82 = vector.broadcast %c3_i32 : i32 to vector<2x128xi32>
    %83 = arith.cmpi eq, %6, %82 : vector<2x128xi32>
    %84 = arith.extui %83 : vector<2x128xi1> to vector<2x128xi32>
    %85 = arith.sitofp %84 : vector<2x128xi32> to vector<2x128xf32>
    %86 = arith.mulf %85, %14 : vector<2x128xf32>
    %87 = arith.addf %71, %86 : vector<2x128xf32>
    %cst_18 = arith.constant 0.666666686 : f32
    %88 = vector.broadcast %cst_18 : f32 to vector<2x128xf32>
    %89 = arith.mulf %88, %21 : vector<2x128xf32>
    %90 = arith.addf %19, %89 : vector<2x128xf32>
    %cst_19 = arith.constant 0.333333343 : f32
    %91 = vector.broadcast %cst_19 : f32 to vector<2x128xf32>
    %92 = arith.mulf %91, %23 : vector<2x128xf32>
    %93 = arith.addf %90, %92 : vector<2x128xf32>
    %94 = arith.mulf %85, %93 : vector<2x128xf32>
    %95 = arith.addf %81, %94 : vector<2x128xf32>
    %96 = arith.subf %30, %87 : vector<2x128xf32>
    %cst_20 = arith.constant 0.000000e+00 : f32
    %97 = vector.broadcast %cst_20 : f32 to vector<2x128xf32>
    %98 = arith.select %33, %96, %97 : vector<2x128xi1>, vector<2x128xf32>
    %99 = arith.mulf %95, %31 : vector<2x128xf32>
    %c0_21 = arith.constant 0 : index
    %c0_22 = arith.constant 0 : index
    %c0_23 = arith.constant 0 : index
    %100 = vector.load %arg4[%c0_21, %c0_22, %c0_23] : memref<1x2x128xf32, #tpu.memory_space<vmem>>, vector<1x2x128xf32>
    %101 = vector.shape_cast %100 : vector<1x2x128xf32> to vector<2x128xf32>
    %102 = arith.addf %101, %98 : vector<2x128xf32>
    %c0_24 = arith.constant 0 : index
    %c0_25 = arith.constant 0 : index
    %c0_26 = arith.constant 0 : index
    %103 = vector.load %arg4[%c0_24, %c0_25, %c0_26] : memref<1x2x128xf32, #tpu.memory_space<vmem>>, vector<1x2x128xf32>
    %104 = vector.shape_cast %103 : vector<1x2x128xf32> to vector<2x128xf32>
    %105 = vector.shape_cast %102 : vector<2x128xf32> to vector<1x2x128xf32>
    tpu.vector_store %arg4[%c0_24, %c0_25, %c0_26], %105 {strides = array<i32>} : memref<1x2x128xf32, #tpu.memory_space<vmem>>, vector<1x2x128xf32>,
    %c0_27 = arith.constant 0 : index
    %c0_28 = arith.constant 0 : index
    %c0_29 = arith.constant 0 : index
    %106 = vector.load %arg5[%c0_27, %c0_28, %c0_29] : memref<1x2x128xf32, #tpu.memory_space<vmem>>, vector<1x2x128xf32>
    %107 = vector.shape_cast %106 : vector<1x2x128xf32> to vector<2x128xf32>
    %108 = arith.addf %107, %99 : vector<2x128xf32>
    %c0_30 = arith.constant 0 : index
    %c0_31 = arith.constant 0 : index
    %c0_32 = arith.constant 0 : index
    %109 = vector.load %arg5[%c0_30, %c0_31, %c0_32] : memref<1x2x128xf32, #tpu.memory_space<vmem>>, vector<1x2x128xf32>
    %110 = vector.shape_cast %109 : vector<1x2x128xf32> to vector<2x128xf32>
    %111 = vector.shape_cast %108 : vector<2x128xf32> to vector<1x2x128xf32>
    tpu.vector_store %arg5[%c0_30, %c0_31, %c0_32], %111 {strides = array<i32>} : memref<1x2x128xf32, #tpu.memory_space<vmem>>, vector<1x2x128xf32>,
    return
  }
  func.func @transform_0(%arg0: i32, %arg1: i32) -> (i32, i32, i32, i32) {
    %c0_i32 = arith.constant 0 : i32
    %c0_i32_0 = arith.constant 0 : i32
    %c0_i32_1 = arith.constant 0 : i32
    return %arg0, %c0_i32, %arg1, %c0_i32_0 : i32, i32, i32, i32
  }
  func.func @transform_1(%arg0: i32, %arg1: i32) -> (i32, i32, i32) {
    %c0_i32 = arith.constant 0 : i32
    %c0_i32_0 = arith.constant 0 : i32
    return %arg0, %arg1, %c0_i32 : i32, i32, i32
  }
  func.func @transform_2(%arg0: i32, %arg1: i32) -> (i32, i32, i32) {
    %c0_i32 = arith.constant 0 : i32
    %c0_i32_0 = arith.constant 0 : i32
    %c0_i32_1 = arith.constant 0 : i32
    return %arg0, %c0_i32, %c0_i32_0 : i32, i32, i32
  }
  func.func @transform_3(%arg0: i32, %arg1: i32) -> (i32, i32, i32) {
    %c0_i32 = arith.constant 0 : i32
    %c0_i32_0 = arith.constant 0 : i32
    %c0_i32_1 = arith.constant 0 : i32
    return %arg0, %c0_i32, %c0_i32_0 : i32, i32, i32
  }
}

</mosaic_0001>

<llo_original>
// kernel: tpu_custom_call.1
$region0: #{tpu_custom_call.1}
  #allocation0 [shape = 'u32[]', space=smem, size = 0x4, offset = 0x4, fixed_abs, tag = 'smem constant byte address 0x4 - core index']
  #allocation1 [shape = 'u32[72,128]{1,0:T(1,128)}', space=vmem, size = 0x9000, scoped, tag = 'internal scratch']
  %s0 = inlined_call_operand.hbm [shape: f32[2,4,2,128], index: 0, kind: input, shape index: {}]
  %s1 = inlined_call_operand.hbm [shape: s32[2,2,128], index: 1, kind: input, shape index: {}]
  %s2 = inlined_call_operand.hbm [shape: f32[2,2,128], index: 2, kind: output, shape index: {0}]
  %s3 = inlined_call_operand.hbm [shape: f32[2,2,128], index: 3, kind: output, shape index: {1}]
  %4 = xla_tuple %s2, %s3
  %s5 = sld [smem:[#allocation0]]
  $region61: #{tpu_custom_call.1} parent=0
    _
  %s7 = ssub.s32 1, %s5
  %s8 = scalar_select 0, %s7, %s5
  $region1: #{tpu_custom_call.1} parent=0
    #allocation2 [shape = 'u8[8192]{0}', space=vmem, size = 0x2000, scoped, tag = 'input window, operand 0']
    #allocation3 [shape = 's32[2]{0}', space=sflag, size = 0x8, scoped, tag = 'scoped memory for tpu_custom_call.1']
    #allocation4 [shape = 's32[2]{0}', space=sflag, size = 0x8, scoped, tag = 'scoped memory for tpu_custom_call.1']
    #allocation5 [shape = 'u8[2048]{0}', space=vmem, size = 0x800, scoped, tag = 'input window, operand 1']
    #allocation6 [shape = 's32[2]{0}', space=sflag, size = 0x8, scoped, tag = 'scoped memory for tpu_custom_call.1']
    #allocation7 [shape = 'u8[2048]{0}', space=vmem, size = 0x800, scoped, tag = 'output window, operand 0']
    #allocation8 [shape = 'u8[2048]{0}', space=vmem, size = 0x800, scoped, tag = 'output window, operand 1']
    #allocation9 [shape = 's32[2]{0}', space=sflag, size = 0x8, scoped, tag = 'scoped memory for tpu_custom_call.1']
    %9 = vsyncpa [#allocation3], 0
    %s10 = scalar_lea.sflag [#allocation3], 1
    %11 = vsyncpa %s10, 0
    %12 = vsyncpa [#allocation6], 0
    %s13 = scalar_lea.sflag [#allocation6], 1
    %14 = vsyncpa %s13, 0
    %15 = vsyncpa [#allocation4], 0
    %s16 = scalar_lea.sflag [#allocation4], 1
    %17 = vsyncpa %s16, 0
    %18 = vsyncpa [#allocation9], 0
    %s19 = scalar_lea.sflag [#allocation9], 1
    %20 = vsyncpa %s19, 0
    loop: start=0, step=1, limit=4
    $region2: #{tpu_custom_call.1} parent=1 // loop_pre_header
      _
    $region3: #{tpu_custom_call.1} parent=1 // loop_header
      %s22 = sphi 0, %s26
      %p23 = scmp.ge.s32.totalorder %s22, 4
      %s29 = sphi 0, %s41
      %s30 = sphi 0, %s37
      %s31 = sphi 0, %s29
      %s32 = sphi 0, %s30
      %s33 = sphi 0, %s31
      %s34 = sphi 0, %s32
      %s46 = sphi 0, %s48
      %s49 = sphi 0, %s46
      %s50 = sphi 0, %s49
      %s66 = sphi 0, %s50
      %s74 = sphi 0, %s76
      %s77 = sphi 0, %s74
      %s78 = sphi 0, %s77
      %s94 = sphi 0, %s78
      %s100 = sphi 0, %s102
      %s103 = sphi 0, %s100
      %s104 = sphi 0, %s103
      %s120 = sphi 0, %s104
      %s126 = sphi 0, %s128
      %s129 = sphi 0, %s126
      %s130 = sphi 0, %s129
      %s146 = sphi 0, %s130
    $region4: #{tpu_custom_call.1} parent=1 // loop_header_branch
      %25 = sbr.rel (%p23) target = $region8
    $region5: #{tpu_custom_call.1} parent=1 // loop_body
      %s27 = ssub.s32 %s22, 1
      %s28 = ssub.s32 %s22, 2
      %s35 = sadd.s32 1, %s30
      %p36 = scmp.ge.s32.totalorder %s35, 1
      %s37 = scalar_select %p36, 0, %s35
      %s38 = sadd.s32 1, %s29
      %s39 = scalar_select %p36, %s38, %s29
      %p40 = scmp.ge.s32.totalorder %s39, 2
      %s41 = scalar_select %p40, 0, %s39
      %s42 = ssub.s32 %s29, %s41
      %s43 = ssub.s32 %s30, %s37
      %s44 = sor.u32 %s42, %s43
      %p45 = scmp.eq.s32.totalorder %s44, 0
      %s47 = sadd.s32 %s46, 1
      %s48 = scalar_select %p45, %s46, %s47
      %p51 = pneg %p45
      %p52 = scmp.eq.s32.totalorder %s22, 1
      %p53 = por %p51, %p52
      %p54 = scmp.ne.s32.totalorder %s46, %s49
      %p55 = scmp.eq.s32.totalorder %s22, 0
      %p56 = por %p54, %p55
      %p57 = scmp.ne.s32.totalorder %s46, %s49
      %p58 = scmp.eq.s32.totalorder %s27, 1
      %p59 = por %p57, %p58
      %p60 = scmp.ne.s32.totalorder %s49, %s50
      %p61 = scmp.eq.s32.totalorder %s27, 0
      %p62 = por %p60, %p61
      %p63 = scmp.ne.s32.totalorder %s49, %s50
      %p64 = scmp.eq.s32.totalorder %s28, 1
      %p65 = por %p63, %p64
      %p67 = scmp.ne.s32.totalorder %s50, %s66
      %p68 = scmp.eq.s32.totalorder %s28, 0
      %p69 = por %p67, %p68
      %s70 = ssub.s32 %s29, %s41
      %s71 = ssub.s32 %s30, %s37
      %s72 = sor.u32 %s70, %s71
      %p73 = scmp.eq.s32.totalorder %s72, 0
      %s75 = sadd.s32 %s74, 1
      %s76 = scalar_select %p73, %s74, %s75
      %p79 = pneg %p73
      %p80 = scmp.eq.s32.totalorder %s22, 1
      %p81 = por %p79, %p80
      %p82 = scmp.ne.s32.totalorder %s74, %s77
      %p83 = scmp.eq.s32.totalorder %s22, 0
      %p84 = por %p82, %p83
      %p85 = scmp.ne.s32.totalorder %s74, %s77
      %p86 = scmp.eq.s32.totalorder %s27, 1
      %p87 = por %p85, %p86
      %p88 = scmp.ne.s32.totalorder %s77, %s78
      %p89 = scmp.eq.s32.totalorder %s27, 0
      %p90 = por %p88, %p89
      %p91 = scmp.ne.s32.totalorder %s77, %s78
      %p92 = scmp.eq.s32.totalorder %s28, 1
      %p93 = por %p91, %p92
      %p95 = scmp.ne.s32.totalorder %s78, %s94
      %p96 = scmp.eq.s32.totalorder %s28, 0
      %p97 = por %p95, %p96
      %s98 = ssub.s32 %s29, %s41
      %p99 = scmp.eq.s32.totalorder %s98, 0
      %s101 = sadd.s32 %s100, 1
      %s102 = scalar_select %p99, %s100, %s101
      %p105 = pneg %p99
      %p106 = scmp.eq.s32.totalorder %s22, 1
      %p107 = por %p105, %p106
      %p108 = scmp.ne.s32.totalorder %s100, %s103
      %p109 = scmp.eq.s32.totalorder %s22, 0
      %p110 = por %p108, %p109
      %p111 = scmp.ne.s32.totalorder %s100, %s103
      %p112 = scmp.eq.s32.totalorder %s27, 1
      %p113 = por %p111, %p112
      %p114 = scmp.ne.s32.totalorder %s103, %s104
      %p115 = scmp.eq.s32.totalorder %s27, 0
      %p116 = por %p114, %p115
      %p117 = scmp.ne.s32.totalorder %s103, %s104
      %p118 = scmp.eq.s32.totalorder %s28, 1
      %p119 = por %p117, %p118
      %p121 = scmp.ne.s32.totalorder %s104, %s120
      %p122 = scmp.eq.s32.totalorder %s28, 0
      %p123 = por %p121, %p122
      %s124 = ssub.s32 %s29, %s41
      %p125 = scmp.eq.s32.totalorder %s124, 0
      %s127 = sadd.s32 %s126, 1
      %s128 = scalar_select %p125, %s126, %s127
      %p131 = pneg %p125
      %p132 = scmp.eq.s32.totalorder %s22, 1
      %p133 = por %p131, %p132
      %p134 = scmp.ne.s32.totalorder %s126, %s129
      %p135 = scmp.eq.s32.totalorder %s22, 0
      %p136 = por %p134, %p135
      %p137 = scmp.ne.s32.totalorder %s126, %s129
      %p138 = scmp.eq.s32.totalorder %s27, 1
      %p139 = por %p137, %p138
      %p140 = scmp.ne.s32.totalorder %s129, %s130
      %p141 = scmp.eq.s32.totalorder %s27, 0
      %p142 = por %p140, %p141
      %p143 = scmp.ne.s32.totalorder %s129, %s130
      %p144 = scmp.eq.s32.totalorder %s28, 1
      %p145 = por %p143, %p144
      %p147 = scmp.ne.s32.totalorder %s130, %s146
      %p148 = scmp.eq.s32.totalorder %s28, 0
      %p149 = por %p147, %p148
      %p150 = scmp.le.s32.totalorder 1, %s22
      %p151 = scmp.lt.s32.totalorder %s22, 3
      %p152 = pnand %p150, %p151
      %p153 = pneg %p152
      // Predicated region
      $region9: #{tpu_custom_call.1} parent=5 // pred_check
        _
      $region10: #{tpu_custom_call.1} parent=5 // pred_check_branch
        %155 = sbr.rel (%p152) target = $region12
      $region11: #{tpu_custom_call.1} parent=5 // pred_region
        %s156 = ssub.s32 %s22, 1
      $region12: #{tpu_custom_call.1} parent=5 // pred_fallthru
        _
      %p157 = scmp.lt.s32.totalorder %s22, 2
      // Predicated region
      $region13: #{tpu_custom_call.1} parent=5 // pred_check
        %p158 = pneg %p157
      $region14: #{tpu_custom_call.1} parent=5 // pred_check_branch
        %160 = sbr.rel (%p158) target = $region16
      $region15: #{tpu_custom_call.1} parent=5 // pred_region
        // Predicated region
        $region17: #{tpu_custom_call.1} parent=15 // pred_check
          %p161 = pneg %p56
        $region18: #{tpu_custom_call.1} parent=15 // pred_check_branch
          %163 = sbr.rel (%p161) target = $region20
        $region19: #{tpu_custom_call.1} parent=15 // pred_region
          %s164 = sand.u32 %s46, 1
          %s165 = scalar_lea.sflag [#allocation3], %s164
          %s166 = sand.u32 %s46, 1
          %s167 = smul.addr %s166, 8
          %s168 = scalar_lea.vmem [#allocation2], %s167
          %170 = vsyncadd %s165, 0
          %s171 = smul.addr %s29, 4
          %s172 = sadd.s32 %s30, %s171
          %s173 = smul.addr %s172, 2
          %s174 = scalar_lea.hbm %s0, %s173
          %s175 = sshll.u32 %s174, 4
          %s176 = int_to_ptr.hbm [resolvable:$true] %s175
          %s177 = sshll.u32 %s168, 4
          %s178 = int_to_ptr.vmem [resolvable:$true] %s177
          %183 = dma.hbm_to_vmem [thread:$0]  %s176, 128, %s178, %s165, 32, 32, 2
        $region20: #{tpu_custom_call.1} parent=15 // pred_fallthru
          _
        // Predicated region
        $region21: #{tpu_custom_call.1} parent=15 // pred_check
          %p184 = pneg %p84
        $region22: #{tpu_custom_call.1} parent=15 // pred_check_branch
          %186 = sbr.rel (%p184) target = $region24
        $region23: #{tpu_custom_call.1} parent=15 // pred_region
          %s187 = sand.u32 %s74, 1
          %s188 = scalar_lea.sflag [#allocation6], %s187
          %s189 = sand.u32 %s74, 1
          %s190 = smul.addr %s189, 2
          %s191 = scalar_lea.vmem [#allocation5], %s190
          %193 = vsyncadd %s188, 0
          %s194 = sadd.s32 %s30, %s29
          %s195 = smul.addr %s194, 2
          %s196 = scalar_lea.hbm %s1, %s195
          %s198 = sshll.u32 %s196, 4
          %s199 = int_to_ptr.hbm [resolvable:$true] %s198
          %s200 = sshll.u32 %s191, 4
          %s201 = int_to_ptr.vmem [resolvable:$true] %s200
          %203 = dma.hbm_to_vmem [thread:$0]  %s199, 32, %s201, %s188
        $region24: #{tpu_custom_call.1} parent=15 // pred_fallthru
          _
      $region16: #{tpu_custom_call.1} parent=5 // pred_fallthru
        _
      %p204 = scmp.le.s32.totalorder 1, %s22
      %p205 = scmp.lt.s32.totalorder %s22, 3
      %p206 = pnand %p204, %p205
      %p207 = pneg %p206
      // Predicated region
      $region25: #{tpu_custom_call.1} parent=5 // pred_check
        _
      $region26: #{tpu_custom_call.1} parent=5 // pred_check_branch
        %209 = sbr.rel (%p206) target = $region28
      $region27: #{tpu_custom_call.1} parent=5 // pred_region
        %s210 = ssub.s32 %s22, 1
        %s211 = sand.u32 %s49, 1
        %s212 = scalar_lea.sflag [#allocation3], %s211
        %s213 = sand.u32 %s49, 1
        %s214 = smul.addr %s213, 8
        %s215 = scalar_lea.vmem [#allocation2], %s214
        // Predicated region
        $region29: #{tpu_custom_call.1} parent=27 // pred_check
          %p216 = pneg %p62
        $region30: #{tpu_custom_call.1} parent=27 // pred_check_branch
          %218 = sbr.rel (%p216) target = $region32
        $region31: #{tpu_custom_call.1} parent=27 // pred_region
          %220 = dma.done %s212, 128
        $region32: #{tpu_custom_call.1} parent=27 // pred_fallthru
          _
        %s221 = sand.u32 %s77, 1
        %s222 = scalar_lea.sflag [#allocation6], %s221
        %s223 = sand.u32 %s77, 1
        %s224 = smul.addr %s223, 2
        %s225 = scalar_lea.vmem [#allocation5], %s224
        // Predicated region
        $region33: #{tpu_custom_call.1} parent=27 // pred_check
          %p226 = pneg %p90
        $region34: #{tpu_custom_call.1} parent=27 // pred_check_branch
          %228 = sbr.rel (%p226) target = $region36
        $region35: #{tpu_custom_call.1} parent=27 // pred_region
          %230 = dma.done %s222, 32
        $region36: #{tpu_custom_call.1} parent=27 // pred_fallthru
          _
        %s231 = sand.u32 %s49, 1
        %s232 = scalar_lea.sflag [#allocation3], %s231
        %s233 = sand.u32 %s49, 1
        %s234 = smul.addr %s233, 8
        %s235 = scalar_lea.vmem [#allocation2], %s234
        %p236 = pneg %p62
        %p237 = pneg %p59
        %s238 = sand.u32 %s77, 1
        %s239 = scalar_lea.sflag [#allocation6], %s238
        %s240 = sand.u32 %s77, 1
        %s241 = smul.addr %s240, 2
        %s242 = scalar_lea.vmem [#allocation5], %s241
        %p243 = pneg %p90
        %p244 = pneg %p87
        %p245 = pneg %p116
        %p246 = pneg %p113
        %s247 = sand.u32 %s103, 1
        %s248 = scalar_lea.sflag [#allocation4], %s247
        %s249 = sand.u32 %s103, 1
        %s250 = smul.addr %s249, 2
        %s251 = scalar_lea.vmem [#allocation7], %s250
        %p252 = pneg %p142
        %p253 = pneg %p139
        %s254 = sand.u32 %s129, 1
        %s255 = scalar_lea.sflag [#allocation9], %s254
        %s256 = sand.u32 %s129, 1
        %s257 = smul.addr %s256, 2
        %s258 = scalar_lea.vmem [#allocation8], %s257
        %p259 = scmp.eq.s32.totalorder %s32, 0
        // Predicated region
        $region37: #{tpu_custom_call.1} parent=27 // pred_check
          %p260 = pneg %p259
        $region38: #{tpu_custom_call.1} parent=27 // pred_check_branch
          %262 = sbr.rel (%p260) target = $region40
        $region39: #{tpu_custom_call.1} parent=27 // pred_region
          %263 = vst [vmem:[%s251] sm:$0x3] 0.0
          %264 = vst [vmem:[%s258] sm:$0x3] 0.0
        $region40: #{tpu_custom_call.1} parent=27 // pred_fallthru
          _
        %v265 = vld [vmem:[%s215] sm:$0x3]
        %v266 = vld [vmem:[%s215 + $0x2] sm:$0x3]
        %v267 = vld [vmem:[%s215 + $0x4] sm:$0x3]
        %v268 = vld [vmem:[%s215 + $0x6] sm:$0x3]
        %v269 = vld [vmem:[%s225] sm:$0x3]
        %v270 = vmax.f32 %v265, %v266
        %v271 = vmax.f32 %v270, %v267
        %v272 = vmax.f32 %v271, %v268
        %v273 = vsub.f32 %v265, %v272
        %v274 = vmul.f32 %v273, 1.442695
        %v275 = vpow.pop %v274
        %v276 = vsub.f32 %v266, %v272
        %v277 = vmul.f32 %v276, 1.442695
        %v278 = vpow.pop %v277
        %v279 = vsub.f32 %v267, %v272
        %v280 = vmul.f32 %v279, 1.442695
        %v281 = vpow.pop %v280
        %v282 = vsub.f32 %v268, %v272
        %v283 = vmul.f32 %v282, 1.442695
        %v284 = vpow.pop %v283
        %v285 = vadd.f32 %v275, %v278
        %v286 = vadd.f32 %v285, %v281
        %v287 = vadd.f32 %v286, %v284
        %v288 = vlog2.pop %v287
        %v289 = vmul.f32 %v288, 0.6931472
        %v290 = vadd.f32 %v272, %v289
        %v291 = vrcp.pop %v287
        %vm292 = vcmp.ge.s32.totalorder %v269, 0
        %vm293 = vcmp.eq.s32.totalorder %v269, 0
        %v294 = vsel %vm293, 1, 0
        %v295 = vcvt.s32.f32 %v294
        %v296 = vmul.f32 %v295, %v265
        %v297 = vadd.f32 %v296, 0.0
        %v298 = vmul.f32 %v278, 0.33333334
        %v299 = vmul.f32 %v281, 0.6666667
        %v300 = vadd.f32 %v298, %v299
        %v301 = vadd.f32 %v300, %v284
        %v302 = vmul.f32 %v295, %v301
        %v303 = vadd.f32 %v302, 0.0
        %vm304 = vcmp.eq.s32.totalorder %v269, 1
        %v305 = vsel %vm304, 1, 0
        %v306 = vcvt.s32.f32 %v305
        %v307 = vmul.f32 %v306, %v266
        %v308 = vadd.f32 %v297, %v307
        %v309 = vmul.f32 %v275, 0.33333334
        %v310 = vmul.f32 %v281, 0.33333334
        %v311 = vadd.f32 %v309, %v310
        %v312 = vmul.f32 %v284, 0.6666667
        %v313 = vadd.f32 %v311, %v312
        %v314 = vmul.f32 %v306, %v313
        %v315 = vadd.f32 %v303, %v314
        %vm316 = vcmp.eq.s32.totalorder %v269, 2
        %v317 = vsel %vm316, 1, 0
        %v318 = vcvt.s32.f32 %v317
        %v319 = vmul.f32 %v318, %v267
        %v320 = vadd.f32 %v308, %v319
        %v321 = vmul.f32 %v275, 0.6666667
        %v322 = vadd.f32 %v321, %v298
        %v323 = vmul.f32 %v284, 0.33333334
        %v324 = vadd.f32 %v322, %v323
        %v325 = vmul.f32 %v318, %v324
        %v326 = vadd.f32 %v315, %v325
        %vm327 = vcmp.eq.s32.totalorder %v269, 3
        %v328 = vsel %vm327, 1, 0
        %v329 = vcvt.s32.f32 %v328
        %v330 = vmul.f32 %v329, %v268
        %v331 = vadd.f32 %v320, %v330
        %v332 = vmul.f32 %v278, 0.6666667
        %v333 = vadd.f32 %v275, %v332
        %v334 = vadd.f32 %v333, %v310
        %v335 = vmul.f32 %v329, %v334
        %v336 = vadd.f32 %v326, %v335
        %v337 = vsub.f32 %v290, %v331
        %v338 = vsel %vm292, %v337, 0.0
        %v339 = vmul.f32 %v336, %v291
        %v340 = vld [vmem:[%s251] sm:$0x3]
        %v341 = vadd.f32 %v340, %v338
        %342 = vst [vmem:[%s251] sm:$0x3] %v341
        %v343 = vld [vmem:[%s258] sm:$0x3]
        %v344 = vadd.f32 %v343, %v339
        %345 = vst [vmem:[%s258] sm:$0x3] %v344
        %s346 = sand.u32 %s103, 1
        %s347 = scalar_lea.sflag [#allocation4], %s346
        %s348 = sand.u32 %s103, 1
        %s349 = smul.addr %s348, 2
        %s350 = scalar_lea.vmem [#allocation7], %s349
        %s351 = sand.u32 %s129, 1
        %s352 = scalar_lea.sflag [#allocation9], %s351
        %s353 = sand.u32 %s129, 1
        %s354 = smul.addr %s353, 2
        %s355 = scalar_lea.vmem [#allocation8], %s354
        // Predicated region
        $region41: #{tpu_custom_call.1} parent=27 // pred_check
          %p356 = pneg %p113
        $region42: #{tpu_custom_call.1} parent=27 // pred_check_branch
          %358 = sbr.rel (%p356) target = $region44
        $region43: #{tpu_custom_call.1} parent=27 // pred_region
          %360 = vsyncadd %s347, 0
          %s361 = smul.addr %s31, 2
          %s362 = scalar_lea.hbm %s2, %s361
          %s364 = sshll.u32 %s350, 4
          %s365 = int_to_ptr.vmem [resolvable:$true] %s364
          %s366 = sshll.u32 %s362, 4
          %s367 = int_to_ptr.hbm [resolvable:$true] %s366
          %369 = dma.vmem_to_hbm [thread:$0]  %s365, 32, %s367, %s347
        $region44: #{tpu_custom_call.1} parent=27 // pred_fallthru
          _
        // Predicated region
        $region45: #{tpu_custom_call.1} parent=27 // pred_check
          %p370 = pneg %p139
        $region46: #{tpu_custom_call.1} parent=27 // pred_check_branch
          %372 = sbr.rel (%p370) target = $region48
        $region47: #{tpu_custom_call.1} parent=27 // pred_region
          %374 = vsyncadd %s352, 0
          %s375 = smul.addr %s31, 2
          %s376 = scalar_lea.hbm %s3, %s375
          %s378 = sshll.u32 %s355, 4
          %s379 = int_to_ptr.vmem [resolvable:$true] %s378
          %s380 = sshll.u32 %s376, 4
          %s381 = int_to_ptr.hbm [resolvable:$true] %s380
          %383 = dma.vmem_to_hbm [thread:$0]  %s379, 32, %s381, %s352
        $region48: #{tpu_custom_call.1} parent=27 // pred_fallthru
          _
      $region28: #{tpu_custom_call.1} parent=5 // pred_fallthru
        _
      %p384 = scmp.le.s32.totalorder 2, %s22
      // Predicated region
      $region49: #{tpu_custom_call.1} parent=5 // pred_check
        %p385 = pneg %p384
      $region50: #{tpu_custom_call.1} parent=5 // pred_check_branch
        %387 = sbr.rel (%p385) target = $region52
      $region51: #{tpu_custom_call.1} parent=5 // pred_region
        %s388 = ssub.s32 %s22, 2
        // Predicated region
        $region53: #{tpu_custom_call.1} parent=51 // pred_check
          %p389 = pneg %p119
        $region54: #{tpu_custom_call.1} parent=51 // pred_check_branch
          %391 = sbr.rel (%p389) target = $region56
        $region55: #{tpu_custom_call.1} parent=51 // pred_region
          %s392 = sand.u32 %s104, 1
          %s393 = scalar_lea.sflag [#allocation4], %s392
          %s394 = sand.u32 %s104, 1
          %s395 = smul.addr %s394, 2
          %s396 = scalar_lea.vmem [#allocation7], %s395
          %398 = dma.done %s393, 32
        $region56: #{tpu_custom_call.1} parent=51 // pred_fallthru
          _
        // Predicated region
        $region57: #{tpu_custom_call.1} parent=51 // pred_check
          %p399 = pneg %p145
        $region58: #{tpu_custom_call.1} parent=51 // pred_check_branch
          %401 = sbr.rel (%p399) target = $region60
        $region59: #{tpu_custom_call.1} parent=51 // pred_region
          %s402 = sand.u32 %s130, 1
          %s403 = scalar_lea.sflag [#allocation9], %s402
          %s404 = sand.u32 %s130, 1
          %s405 = smul.addr %s404, 2
          %s406 = scalar_lea.vmem [#allocation8], %s405
          %408 = dma.done %s403, 32
        $region60: #{tpu_custom_call.1} parent=51 // pred_fallthru
          _
      $region52: #{tpu_custom_call.1} parent=5 // pred_fallthru
        _
    $region6: #{tpu_custom_call.1} parent=1 // loop_footer
      %s26 = sadd.s32 1, %s22
    $region7: #{tpu_custom_call.1} parent=1 // loop_footer_branch
      %21 = sbr.rel target = $region3
    $region8: #{tpu_custom_call.1} parent=1 // loop_exit
      _
    %409 = vsyncpa [#allocation3], 1
    %s410 = scalar_lea.sflag [#allocation3], 1
    %411 = vsyncpa %s410, 1
    %412 = vsyncpa [#allocation6], 1
    %s413 = scalar_lea.sflag [#allocation6], 1
    %414 = vsyncpa %s413, 1
    %415 = vsyncpa [#allocation4], 1
    %s416 = scalar_lea.sflag [#allocation4], 1
    %417 = vsyncpa %s416, 1
    %418 = vsyncpa [#allocation9], 1
    %s419 = scalar_lea.sflag [#allocation9], 1
    %420 = vsyncpa %s419, 1

</llo_original>
